<compile_context>
chip_gen: v7x
topology: tpu7x:2x2x1
jax: 0.10.0
libtpu: 0.0.40
codegen_flags: <defaults>
</compile_context>

<pallas_src>
import jax
import jax.numpy as jnp
from jax.experimental import pallas as pl
from jax.experimental.pallas import tpu as pltpu


_VMEM_BUDGET_BYTES = 28 << 20   # target for the double-buffered working set
_VMEM_LIMIT_BYTES = 40 << 20    # < 64 MiB physical on v7x; raises v5e default


def _softplus_clamp50(x):
    # torch.clamp(F.softplus(x), 0, 50) == clip(logaddexp(x, 0), 0, 50)
    return jnp.clip(jnp.logaddexp(x, 0.0), 0.0, 50.0)


def _round_up(x, m):
    return ((x + m - 1) // m) * m


def _largest_dividing_tile(n_pad, cap):
    """Largest multiple of 128 that divides n_pad and is <= cap (>=128)."""
    best = 128
    t = 128
    limit = min(cap, n_pad)
    while t <= limit:
        if n_pad % t == 0:
            best = t
        t += 128
    return best


# ----------------------------------------------------------------------------
# Kernels
# ----------------------------------------------------------------------------
def _epilogue(lin, u, s, b, beta, gamma, du_ref, ds_ref):
    alpha = _softplus_clamp50(lin + b)     # (tm, tn), bias broadcast from (1, tn)
    bu = beta * u                          # computed once, reused for du and ds
    du_ref[...] = (alpha - bu).astype(du_ref.dtype)
    ds_ref[...] = (bu - gamma * s).astype(ds_ref.dtype)


def _make_single_k_kernel():
    """N_pad <= tk: whole reduction in one MXU pass, no VMEM accumulator."""
    def kernel(u_ref, s_ep_ref, s_k_ref, wt_ref, b_ref, beta_ref, gamma_ref,
               du_ref, ds_ref):
        lin = jnp.dot(s_k_ref[...], wt_ref[...],
                      preferred_element_type=jnp.float32)
        _epilogue(lin, u_ref[...], s_ep_ref[...], b_ref[...],
                  beta_ref[...], gamma_ref[...], du_ref, ds_ref)
    return kernel


def _make_multi_k_kernel(num_k):
    """Grid = (B/tm, N/tn, K/tk); K innermost. First k overwrites the
    accumulator (no zero-init pass); last k fuses the fresh partial into the
    epilogue (no extra acc store/load)."""
    def kernel(u_ref, s_ep_ref, s_k_ref, wt_ref, b_ref, beta_ref, gamma_ref,
               du_ref, ds_ref, acc_ref):
        k = pl.program_id(2)
        partial = jnp.dot(s_k_ref[...], wt_ref[...],
                          preferred_element_type=jnp.float32)

        @pl.when(k == 0)
        def _():
            acc_ref[...] = partial

        @pl.when(jnp.logical_and(k > 0, k < num_k - 1))
        def _():
            acc_ref[...] += partial

        @pl.when(k == num_k - 1)
        def _():
            lin = acc_ref[...] + partial
            _epilogue(lin, u_ref[...], s_ep_ref[...], b_ref[...],
                      beta_ref[...], gamma_ref[...], du_ref, ds_ref)
    return kernel


# ----------------------------------------------------------------------------
# Parameter preparation (hoist out of the per-step forward and reuse)
# ----------------------------------------------------------------------------
def prepare_velocity_encoder_params(W, bias, beta_mean_unconstr, gamma_mean_unconstr):
    """Pad + transpose fc1.weight once and pre-activate the per-gene rates.

    Reuse the returned tuple across forward calls so the N_pad x N_pad
    transposed weight is not re-materialized in HBM every step.
    """
    N = W.shape[0]
    N_pad = _round_up(N, 128)
    pad = N_pad - N
    Wt_p = jnp.pad(W, ((0, pad), (0, pad))).T                        # (K_pad, N_pad)
    b_p = jnp.pad(bias, (0, pad)).reshape(1, N_pad)
    beta_p = _softplus_clamp50(jnp.pad(beta_mean_unconstr, (0, pad))).reshape(1, N_pad)
    gamma_p = _softplus_clamp50(jnp.pad(gamma_mean_unconstr, (0, pad))).reshape(1, N_pad)
    return (Wt_p, b_p, beta_p, gamma_p, N)


# ----------------------------------------------------------------------------
# Forward
# ----------------------------------------------------------------------------
def velocity_encoder_apply(t, u, s, prepared, *, tm_cap=512, tn_cap=512, tk_cap=2048):
    """t is unused (kept for API parity with the PyTorch forward)."""
    del t
    Wt_p, b_p, beta_p, gamma_p, N = prepared
    B = u.shape[0]
    assert u.shape == (B, N) and s.shape == (B, N)
    dtype = u.dtype
    N_pad = Wt_p.shape[0]

    # ---- tile selection: tn/tk are 128-multiple divisors of N_pad, so the
    # grid is exact and padding never exceeds the 128-granular N_pad.
    tm = min(_round_up(B, 8), max(8, _round_up(tm_cap, 8)))
    tn = _largest_dividing_tile(N_pad, tn_cap)
    tk = _largest_dividing_tile(N_pad, tk_cap)

    # ---- shrink until the (conservative, acc always counted) double-buffered
    # footprint fits the VMEM budget.
    def _footprint(tm_, tn_, tk_):
        elems = 2 * (4 * tm_ * tn_ + tm_ * tk_ + tk_ * tn_ + 3 * tn_) + tm_ * tn_
        return elems * 4
    while _footprint(tm, tn, tk) > _VMEM_BUDGET_BYTES:
        if tk >= 256:
            tk //= 2
        elif tn >= 256:
            tn //= 2
        elif tm >= 16:
            tm = _round_up(tm // 2, 8)
        else:
            break

    B_pad = _round_up(B, tm)

    # ---- v7x megacore: make sure the parallel (i, j) grid has >= 2 tiles when
    # the gene dimension allows it, so both TensorCores get work.
    if B_pad // tm == 1 and N_pad // tn == 1 and N_pad >= 256:
        tn = _largest_dividing_tile(N_pad, N_pad // 2)

    num_k = N_pad // tk
    grid = (B_pad // tm, N_pad // tn, num_k)

    # ---- pad activations to the lane/sublane-aligned slab.
    pad2 = lambda a: jnp.pad(a, ((0, B_pad - B), (0, N_pad - N)))
    u_p = pad2(u)
    s_p = pad2(s)

    if num_k == 1:
        kernel = _make_single_k_kernel()
        scratch = []
    else:
        kernel = _make_multi_k_kernel(num_k)
        scratch = [pltpu.VMEM((tm, tn), jnp.float32)]

    du_p, ds_p = pl.pallas_call(
        kernel,
        out_shape=(
            jax.ShapeDtypeStruct((B_pad, N_pad), dtype),
            jax.ShapeDtypeStruct((B_pad, N_pad), dtype),
        ),
        grid=grid,
        in_specs=[
            pl.BlockSpec((tm, tn), lambda i, j, k: (i, j)),   # u        (epilogue)
            pl.BlockSpec((tm, tn), lambda i, j, k: (i, j)),   # s        (epilogue)
            pl.BlockSpec((tm, tk), lambda i, j, k: (i, k)),   # s        (matmul LHS)
            pl.BlockSpec((tk, tn), lambda i, j, k: (k, j)),   # W.T      (matmul RHS)
            pl.BlockSpec((1, tn), lambda i, j, k: (0, j)),    # bias
            pl.BlockSpec((1, tn), lambda i, j, k: (0, j)),    # softplus(beta)
            pl.BlockSpec((1, tn), lambda i, j, k: (0, j)),    # softplus(gamma)
        ],
        out_specs=(
            pl.BlockSpec((tm, tn), lambda i, j, k: (i, j)),   # du
            pl.BlockSpec((tm, tn), lambda i, j, k: (i, j)),   # ds
        ),
        scratch_shapes=scratch,
        compiler_params=pltpu.CompilerParams(
            dimension_semantics=("parallel", "parallel", "arbitrary"),
            vmem_limit_bytes=_VMEM_LIMIT_BYTES),
    )(u_p, s_p, s_p, Wt_p, b_p, beta_p, gamma_p)

    return du_p[:B, :N], ds_p[:B, :N]


def velocity_encoder_forward(t, u, s, W, bias, beta_mean_unconstr,
                             gamma_mean_unconstr, **tile_caps):
    """Convenience wrapper (prepares params per call). For repeated forward
    calls, hoist prepare_velocity_encoder_params() and use *_apply directly."""
    prepared = prepare_velocity_encoder_params(
        W, bias, beta_mean_unconstr, gamma_mean_unconstr)
    return velocity_encoder_apply(t, u, s, prepared, **tile_caps)


# ----------------------------------------------------------------------------
# Reference + demo
# ----------------------------------------------------------------------------
def _reference(u, s, W, bias, beta_u, gamma_u):
    sp = lambda x: jnp.clip(jnp.logaddexp(x, 0.0), 0.0, 50.0)
    alpha = sp(jnp.dot(s, W.T, precision=jax.lax.Precision.HIGHEST) + bias)
    beta = sp(beta_u)
    gamma = sp(gamma_u)
    return alpha - beta * u, beta * u - gamma * s


if __name__ == "__main__":
    key = jax.random.PRNGKey(0)

    def make_case(key, B, N):
        k_u, k_s, k_w, k_b, k_beta, k_gamma = jax.random.split(key, 6)
        u = jax.random.uniform(k_u, (B, N), dtype=jnp.float32)
        s = jax.random.uniform(k_s, (B, N), dtype=jnp.float32)
        bound = 1.0 / jnp.sqrt(jnp.float32(N))
        W = jax.random.uniform(k_w, (N, N), dtype=jnp.float32, minval=-bound, maxval=bound)
        bias = jax.random.uniform(k_b, (N,), dtype=jnp.float32, minval=-bound, maxval=bound)
        beta_u = jax.random.normal(k_beta, (N,), dtype=jnp.float32) * 0.5
        gamma_u = jax.random.normal(k_gamma, (N,), dtype=jnp.float32) * 0.5
        return u, s, W, bias, beta_u, gamma_u

    k1, k2, k3 = jax.random.split(key, 3)
    cases = (
        # (key, B, N, tile-cap overrides)
        (k1, 8, 32, {}),                                          # module-sized demo
        (k2, 20, 200, {}),                                        # unaligned, padded
        (k3, 20, 300, dict(tm_cap=8, tn_cap=128, tk_cap=128)),    # multi-tile + K accumulator
    )
    for kk, B, N, caps in cases:
        u, s, W, bias, beta_u, gamma_u = make_case(kk, B, N)
        prepared = prepare_velocity_encoder_params(W, bias, beta_u, gamma_u)
        du, ds = velocity_encoder_apply(0.0, u, s, prepared, **caps)
        jax.block_until_ready((du, ds))
        du_ref, ds_ref = _reference(u, s, W, bias, beta_u, gamma_u)
        assert jnp.allclose(du, du_ref, atol=1e-5, rtol=1e-5), (B, N, "du mismatch")
        assert jnp.allclose(ds, ds_ref, atol=1e-5, rtol=1e-5), (B, N, "ds mismatch")

    print("KERNEL_OK")
</pallas_src>

<mosaic_0001>
module attributes {stable_mosaic.version = 11 : i64} {
  func.func @kernel(%arg0: i32, %arg1: i32, %arg2: i32, %arg3: memref<8x128xf32, #tpu.memory_space<vmem>>, %arg4: memref<8x128xf32, #tpu.memory_space<vmem>>, %arg5: memref<8x128xf32, #tpu.memory_space<vmem>>, %arg6: memref<128x128xf32, #tpu.memory_space<vmem>>, %arg7: memref<1x128xf32, #tpu.memory_space<vmem>>, %arg8: memref<1x128xf32, #tpu.memory_space<vmem>>, %arg9: memref<1x128xf32, #tpu.memory_space<vmem>>, %arg10: memref<8x128xf32, #tpu.memory_space<vmem>>, %arg11: memref<8x128xf32, #tpu.memory_space<vmem>>) attributes {dimension_semantics = [#tpu.dimension_semantics<parallel>, #tpu.dimension_semantics<parallel>, #tpu.dimension_semantics<arbitrary>], iteration_bounds = array<i64: 1, 1, 1>, scalar_prefetch = 0 : i64, scratch_operands = 0 : i64, tpu.core_type = #tpu.core_type<tc>, window_params = [{transform_indices = @transform_0, window_bounds = array<i64: 8, 128>}, {transform_indices = @transform_1, window_bounds = array<i64: 8, 128>}, {transform_indices = @transform_2, window_bounds = array<i64: 8, 128>}, {transform_indices = @transform_3, window_bounds = array<i64: 128, 128>}, {transform_indices = @transform_4, window_bounds = array<i64: 1, 128>}, {transform_indices = @transform_5, window_bounds = array<i64: 1, 128>}, {transform_indices = @transform_6, window_bounds = array<i64: 1, 128>}, {transform_indices = @transform_7, window_bounds = array<i64: 8, 128>}, {transform_indices = @transform_8, window_bounds = array<i64: 8, 128>}]} {
    %c0 = arith.constant 0 : index
    %c0_0 = arith.constant 0 : index
    %0 = vector.load %arg5[%c0, %c0_0] : memref<8x128xf32, #tpu.memory_space<vmem>>, vector<8x128xf32>
    %c0_1 = arith.constant 0 : index
    %c0_2 = arith.constant 0 : index
    %1 = vector.load %arg6[%c0_1, %c0_2] : memref<128x128xf32, #tpu.memory_space<vmem>>, vector<128x128xf32>
    %cst = arith.constant dense<0.000000e+00> : vector<8x128xf32>
    %2 = tpu.matmul %0, %1, %cst {dimension_numbers = #tpu.dot_dimension_numbers<[1], [0], [0], [1], [0, 0, 1, 1], [], []>} : vector<8x128xf32>, vector<128x128xf32>, vector<8x128xf32> -> vector<8x128xf32>
    %c0_3 = arith.constant 0 : index
    %c0_4 = arith.constant 0 : index
    %3 = vector.load %arg3[%c0_3, %c0_4] : memref<8x128xf32, #tpu.memory_space<vmem>>, vector<8x128xf32>
    %c0_5 = arith.constant 0 : index
    %c0_6 = arith.constant 0 : index
    %4 = vector.load %arg4[%c0_5, %c0_6] : memref<8x128xf32, #tpu.memory_space<vmem>>, vector<8x128xf32>
    %c0_7 = arith.constant 0 : index
    %c0_8 = arith.constant 0 : index
    %5 = vector.load %arg7[%c0_7, %c0_8] : memref<1x128xf32, #tpu.memory_space<vmem>>, vector<1x128xf32>
    %c0_9 = arith.constant 0 : index
    %c0_10 = arith.constant 0 : index
    %6 = vector.load %arg8[%c0_9, %c0_10] : memref<1x128xf32, #tpu.memory_space<vmem>>, vector<1x128xf32>
    %c0_11 = arith.constant 0 : index
    %c0_12 = arith.constant 0 : index
    %7 = vector.load %arg9[%c0_11, %c0_12] : memref<1x128xf32, #tpu.memory_space<vmem>>, vector<1x128xf32>
    %8 = vector.broadcast %5 : vector<1x128xf32> to vector<8x128xf32>
    %9 = arith.addf %2, %8 : vector<8x128xf32>
    %cst_13 = arith.constant 0.000000e+00 : f32
    %10 = vector.broadcast %cst_13 : f32 to vector<8x128xf32>
    %11 = arith.maximumf %9, %10 : vector<8x128xf32>
    %12 = vector.broadcast %cst_13 : f32 to vector<8x128xf32>
    %13 = arith.subf %9, %12 : vector<8x128xf32>
    %14 = arith.cmpf one, %13, %13 : vector<8x128xf32>
    %15 = vector.broadcast %cst_13 : f32 to vector<8x128xf32>
    %16 = arith.addf %9, %15 : vector<8x128xf32>
    %17 = math.absf %13 : vector<8x128xf32>
    %cst_14 = arith.constant 0.000000e+00 : f32
    %18 = vector.broadcast %cst_14 : f32 to vector<8x128xf32>
    %19 = arith.subf %18, %17 : vector<8x128xf32>
    %20 = math.exp %19 : vector<8x128xf32>
    %21 = math.log1p %20 : vector<8x128xf32>
    %22 = arith.addf %11, %21 : vector<8x128xf32>
    %23 = arith.select %14, %16, %22 : vector<8x128xi1>, vector<8x128xf32>
    %cst_15 = arith.constant 0.000000e+00 : f32
    %cst_16 = arith.constant 5.000000e+01 : f32
    %24 = vector.broadcast %cst_15 : f32 to vector<8x128xf32>
    %25 = arith.maximumf %24, %23 : vector<8x128xf32>
    %26 = vector.broadcast %cst_16 : f32 to vector<8x128xf32>
    %27 = arith.minimumf %26, %25 : vector<8x128xf32>
    %28 = vector.broadcast %6 : vector<1x128xf32> to vector<8x128xf32>
    %29 = arith.mulf %28, %3 : vector<8x128xf32>
    %30 = arith.subf %27, %29 : vector<8x128xf32>
    %c0_17 = arith.constant 0 : index
    %c0_18 = arith.constant 0 : index
    %31 = vector.load %arg10[%c0_17, %c0_18] : memref<8x128xf32, #tpu.memory_space<vmem>>, vector<8x128xf32>
    tpu.vector_store %arg10[%c0_17, %c0_18], %30 {strides = array<i32>} : memref<8x128xf32, #tpu.memory_space<vmem>>, vector<8x128xf32>,
    %32 = vector.broadcast %7 : vector<1x128xf32> to vector<8x128xf32>
    %33 = arith.mulf %32, %4 : vector<8x128xf32>
    %34 = arith.subf %29, %33 : vector<8x128xf32>
    %c0_19 = arith.constant 0 : index
    %c0_20 = arith.constant 0 : index
    %35 = vector.load %arg11[%c0_19, %c0_20] : memref<8x128xf32, #tpu.memory_space<vmem>>, vector<8x128xf32>
    tpu.vector_store %arg11[%c0_19, %c0_20], %34 {strides = array<i32>} : memref<8x128xf32, #tpu.memory_space<vmem>>, vector<8x128xf32>,
    return
  }
  func.func @transform_0(%arg0: i32, %arg1: i32, %arg2: i32) -> (i32, i32) {
    %c0_i32 = arith.constant 0 : i32
    return %arg0, %arg1 : i32, i32
  }
  func.func @transform_1(%arg0: i32, %arg1: i32, %arg2: i32) -> (i32, i32) {
    %c0_i32 = arith.constant 0 : i32
    return %arg0, %arg1 : i32, i32
  }
  func.func @transform_2(%arg0: i32, %arg1: i32, %arg2: i32) -> (i32, i32) {
    %c0_i32 = arith.constant 0 : i32
    return %arg0, %arg2 : i32, i32
  }
  func.func @transform_3(%arg0: i32, %arg1: i32, %arg2: i32) -> (i32, i32) {
    %c0_i32 = arith.constant 0 : i32
    return %arg2, %arg1 : i32, i32
  }
  func.func @transform_4(%arg0: i32, %arg1: i32, %arg2: i32) -> (i32, i32) {
    %c0_i32 = arith.constant 0 : i32
    %c0_i32_0 = arith.constant 0 : i32
    return %c0_i32, %arg1 : i32, i32
  }
  func.func @transform_5(%arg0: i32, %arg1: i32, %arg2: i32) -> (i32, i32) {
    %c0_i32 = arith.constant 0 : i32
    %c0_i32_0 = arith.constant 0 : i32
    return %c0_i32, %arg1 : i32, i32
  }
  func.func @transform_6(%arg0: i32, %arg1: i32, %arg2: i32) -> (i32, i32) {
    %c0_i32 = arith.constant 0 : i32
    %c0_i32_0 = arith.constant 0 : i32
    return %c0_i32, %arg1 : i32, i32
  }
  func.func @transform_7(%arg0: i32, %arg1: i32, %arg2: i32) -> (i32, i32) {
    %c0_i32 = arith.constant 0 : i32
    return %arg0, %arg1 : i32, i32
  }
  func.func @transform_8(%arg0: i32, %arg1: i32, %arg2: i32) -> (i32, i32) {
    %c0_i32 = arith.constant 0 : i32
    return %arg0, %arg1 : i32, i32
  }
}

</mosaic_0001>

<llo_original>
// kernel: tpu_custom_call.1
$region0: #{tpu_custom_call.1}
  #allocation0 [shape = 'u32[]', space=smem, size = 0x4, offset = 0x4, fixed_abs, tag = 'smem constant byte address 0x4 - core index']
  #allocation1 [shape = 'u32[144,128]{1,0:T(1,128)}', space=vmem, size = 0x12000, scoped, tag = 'internal scratch']
  %s0 = inlined_call_operand.hbm [shape: f32[8,128], index: 0, kind: input, shape index: {}]
  %s1 = inlined_call_operand.hbm [shape: f32[8,128], index: 1, kind: input, shape index: {}]
  %s2 = inlined_call_operand.hbm [shape: f32[8,128], index: 2, kind: input, shape index: {}]
  %s3 = inlined_call_operand.hbm [shape: f32[128,128], index: 3, kind: input, shape index: {}]
  %s4 = inlined_call_operand.vmem [shape: f32[1,128], index: 4, kind: input, shape index: {}]
  %s5 = inlined_call_operand.vmem [shape: f32[1,128], index: 5, kind: input, shape index: {}]
  %s6 = inlined_call_operand.vmem [shape: f32[1,128], index: 6, kind: input, shape index: {}]
  %s7 = inlined_call_operand.hbm [shape: f32[8,128], index: 7, kind: output, shape index: {0}]
  %s8 = inlined_call_operand.hbm [shape: f32[8,128], index: 8, kind: output, shape index: {1}]
  %9 = xla_tuple %s7, %s8
  %s10 = sld [smem:[#allocation0]]
  $region62: #{tpu_custom_call.1} parent=0
    _
  %s12 = ssub.s32 1, %s10
  %s13 = scalar_select 0, %s12, %s10
  $region1: #{tpu_custom_call.1} parent=0
    #allocation2 [shape = 'u8[4096]{0}', space=vmem, size = 0x1000, scoped, tag = 'input window, operand 0, single buffered']
    #allocation3 [shape = 's32[1]{0}', space=sflag, size = 0x4, scoped, tag = 'scoped memory for tpu_custom_call.1']
    #allocation4 [shape = 's32[1]{0}', space=sflag, size = 0x4, scoped, tag = 'scoped memory for tpu_custom_call.1']
    #allocation5 [shape = 'u8[4096]{0}', space=vmem, size = 0x1000, scoped, tag = 'input window, operand 1, single buffered']
    #allocation6 [shape = 's32[1]{0}', space=sflag, size = 0x4, scoped, tag = 'scoped memory for tpu_custom_call.1']
    #allocation7 [shape = 'u8[4096]{0}', space=vmem, size = 0x1000, scoped, tag = 'input window, operand 2, single buffered']
    #allocation8 [shape = 'u8[65536]{0}', space=vmem, size = 0x10000, scoped, tag = 'input window, operand 3, single buffered']
    #allocation9 [shape = 's32[1]{0}', space=sflag, size = 0x4, scoped, tag = 'scoped memory for tpu_custom_call.1']
    #allocation10 [shape = 'u8[4096]{0}', space=vmem, size = 0x1000, scoped, tag = 'output window, operand 0, single buffered']
    #allocation11 [shape = 'u8[4096]{0}', space=vmem, size = 0x1000, scoped, tag = 'output window, operand 1, single buffered']
    #allocation12 [shape = 's32[1]{0}', space=sflag, size = 0x4, scoped, tag = 'scoped memory for tpu_custom_call.1']
    %14 = vsyncpa [#allocation3], 0
    %15 = vsyncpa [#allocation6], 0
    %16 = vsyncpa [#allocation9], 0
    %17 = vsyncpa [#allocation4], 0
    %18 = vsyncpa [#allocation12], 0
    // Predicated region
    $region2: #{tpu_custom_call.1} parent=1 // pred_check
      _
    $region3: #{tpu_custom_call.1} parent=1 // pred_check_branch
      %20 = sbr.rel (0) target = $region5
    $region4: #{tpu_custom_call.1} parent=1 // pred_region
      %s22 = ssub.s32 128, 128
      %23 = vsyncadd [#allocation3], %s22
      %s25 = sshll.u32 [#allocation2], 4
      %s26 = int_to_ptr.vmem [resolvable:$true] %s25
      %28 = dma.hbm_to_vmem [thread:$0]  %s0, 128, %s26, [#allocation3]
    $region5: #{tpu_custom_call.1} parent=1 // pred_fallthru
      _
    // Predicated region
    $region6: #{tpu_custom_call.1} parent=1 // pred_check
      _
    $region7: #{tpu_custom_call.1} parent=1 // pred_check_branch
      %30 = sbr.rel (0) target = $region9
    $region8: #{tpu_custom_call.1} parent=1 // pred_region
      %s32 = ssub.s32 128, 128
      %33 = vsyncadd [#allocation6], %s32
      %s35 = sshll.u32 [#allocation5], 4
      %s36 = int_to_ptr.vmem [resolvable:$true] %s35
      %38 = dma.hbm_to_vmem [thread:$0]  %s1, 128, %s36, [#allocation6]
    $region9: #{tpu_custom_call.1} parent=1 // pred_fallthru
      _
    // Predicated region
    $region10: #{tpu_custom_call.1} parent=1 // pred_check
      _
    $region11: #{tpu_custom_call.1} parent=1 // pred_check_branch
      %40 = sbr.rel (0) target = $region13
    $region12: #{tpu_custom_call.1} parent=1 // pred_region
      %s42 = ssub.s32 128, 128
      %43 = vsyncadd [#allocation6], %s42
      %s45 = sshll.u32 [#allocation7], 4
      %s46 = int_to_ptr.vmem [resolvable:$true] %s45
      %48 = dma.hbm_to_vmem [thread:$0]  %s2, 128, %s46, [#allocation6]
    $region13: #{tpu_custom_call.1} parent=1 // pred_fallthru
      _
    // Predicated region
    $region14: #{tpu_custom_call.1} parent=1 // pred_check
      _
    $region15: #{tpu_custom_call.1} parent=1 // pred_check_branch
      %50 = sbr.rel (0) target = $region17
    $region16: #{tpu_custom_call.1} parent=1 // pred_region
      %s52 = ssub.s32 2048, 2048
      %53 = vsyncadd [#allocation9], %s52
      %s54 = sshll.u32 [#allocation8], 4
      %s55 = int_to_ptr.vmem [resolvable:$true] %s54
      %60 = dma.hbm_to_vmem [thread:$0]  %s3, 2048, %s55, [#allocation9], 128, 128, 8
    $region17: #{tpu_custom_call.1} parent=1 // pred_fallthru
      _
    // Predicated region
    $region18: #{tpu_custom_call.1} parent=1 // pred_check
      _
    $region19: #{tpu_custom_call.1} parent=1 // pred_check_branch
      %62 = sbr.rel (0) target = $region21
    $region20: #{tpu_custom_call.1} parent=1 // pred_region
      _
    $region21: #{tpu_custom_call.1} parent=1 // pred_fallthru
      _
    // Predicated region
    $region22: #{tpu_custom_call.1} parent=1 // pred_check
      _
    $region23: #{tpu_custom_call.1} parent=1 // pred_check_branch
      %64 = sbr.rel (0) target = $region25
    $region24: #{tpu_custom_call.1} parent=1 // pred_region
      _
    $region25: #{tpu_custom_call.1} parent=1 // pred_fallthru
      _
    // Predicated region
    $region26: #{tpu_custom_call.1} parent=1 // pred_check
      _
    $region27: #{tpu_custom_call.1} parent=1 // pred_check_branch
      %66 = sbr.rel (0) target = $region29
    $region28: #{tpu_custom_call.1} parent=1 // pred_region
      _
    $region29: #{tpu_custom_call.1} parent=1 // pred_fallthru
      _
    // Predicated region
    $region30: #{tpu_custom_call.1} parent=1 // pred_check
      _
    $region31: #{tpu_custom_call.1} parent=1 // pred_check_branch
      %68 = sbr.rel (0) target = $region33
    $region32: #{tpu_custom_call.1} parent=1 // pred_region
      %69 = dma.done [#allocation3], 128
    $region33: #{tpu_custom_call.1} parent=1 // pred_fallthru
      _
    // Predicated region
    $region34: #{tpu_custom_call.1} parent=1 // pred_check
      _
    $region35: #{tpu_custom_call.1} parent=1 // pred_check_branch
      %71 = sbr.rel (0) target = $region37
    $region36: #{tpu_custom_call.1} parent=1 // pred_region
      %72 = dma.done [#allocation6], 128
    $region37: #{tpu_custom_call.1} parent=1 // pred_fallthru
      _
    // Predicated region
    $region38: #{tpu_custom_call.1} parent=1 // pred_check
      _
    $region39: #{tpu_custom_call.1} parent=1 // pred_check_branch
      %74 = sbr.rel (0) target = $region41
    $region40: #{tpu_custom_call.1} parent=1 // pred_region
      %75 = dma.done [#allocation6], 128
    $region41: #{tpu_custom_call.1} parent=1 // pred_fallthru
      _
    // Predicated region
    $region42: #{tpu_custom_call.1} parent=1 // pred_check
      _
    $region43: #{tpu_custom_call.1} parent=1 // pred_check_branch
      %77 = sbr.rel (0) target = $region45
    $region44: #{tpu_custom_call.1} parent=1 // pred_region
      %78 = dma.done [#allocation9], 2048
    $region45: #{tpu_custom_call.1} parent=1 // pred_fallthru
      _
    %v79 = vld [vmem:[#allocation7] sm:$0xff]
    %v80 = vld [vmem:[#allocation8] sm:$0xff]
    %v81 = vld [vmem:[#allocation8 + $0x8] sm:$0xff]
    %v82 = vld [vmem:[#allocation8 + $0x10] sm:$0xff]
    %v83 = vld [vmem:[#allocation8 + $0x18] sm:$0xff]
    %v84 = vld [vmem:[#allocation8 + $0x20] sm:$0xff]
    %v85 = vld [vmem:[#allocation8 + $0x28] sm:$0xff]
    %v86 = vld [vmem:[#allocation8 + $0x30] sm:$0xff]
    %v87 = vld [vmem:[#allocation8 + $0x38] sm:$0xff]
    %v88 = vld [vmem:[#allocation8 + $0x40] sm:$0xff]
    %v89 = vld [vmem:[#allocation8 + $0x48] sm:$0xff]
    %v90 = vld [vmem:[#allocation8 + $0x50] sm:$0xff]
    %v91 = vld [vmem:[#allocation8 + $0x58] sm:$0xff]
    %v92 = vld [vmem:[#allocation8 + $0x60] sm:$0xff]
    %v93 = vld [vmem:[#allocation8 + $0x68] sm:$0xff]
    %v94 = vld [vmem:[#allocation8 + $0x70] sm:$0xff]
    %v95 = vld [vmem:[#allocation8 + $0x78] sm:$0xff]
    %v96 = vld [vmem:[#allocation2] sm:$0xff]
    %v97 = vld [vmem:[#allocation5] sm:$0xff]
    %v98 = vld [vmem:[%s4] sm:$0x1]
    %v99 = vld [vmem:[%s5] sm:$0x1]
    %v100 = vld [vmem:[%s6] sm:$0x1]
    %v102 = vlaneseq
    %v103 = vshrl.u32 %v102, 7
    %v104 = vsub.s32 0, %v103
    %v105 = vrot.slane %v98, %v104
    %107 = vmatprep.subr.mxu0 0.0
    %108 = vmatpush1.msra.mxu0 %v80
    %109 = vmatprep.subr.mxu0 0.0
    %110 = vmatpush1.msra.mxu0 %v81
    %111 = vmatprep.subr.mxu0 0.0
    %112 = vmatpush1.msra.mxu0 %v82
    %113 = vmatprep.subr.mxu0 0.0
    %114 = vmatpush1.msra.mxu0 %v83
    %115 = vmatprep.subr.mxu0 0.0
    %116 = vmatpush1.msra.mxu0 %v84
    %117 = vmatprep.subr.mxu0 0.0
    %118 = vmatpush1.msra.mxu0 %v85
    %119 = vmatprep.subr.mxu0 0.0
    %120 = vmatpush1.msra.mxu0 %v86
    %121 = vmatprep.subr.mxu0 0.0
    %122 = vmatpush1.msra.mxu0 %v87
    %123 = vmatprep.subr.mxu0 0.0
    %124 = vmatpush1.msra.mxu0 %v88
    %125 = vmatprep.subr.mxu0 0.0
    %126 = vmatpush1.msra.mxu0 %v89
    %127 = vmatprep.subr.mxu0 0.0
    %128 = vmatpush1.msra.mxu0 %v90
    %129 = vmatprep.subr.mxu0 0.0
    %130 = vmatpush1.msra.mxu0 %v91
    %131 = vmatprep.subr.mxu0 0.0
    %132 = vmatpush1.msra.mxu0 %v92
    %133 = vmatprep.subr.mxu0 0.0
    %134 = vmatpush1.msra.mxu0 %v93
    %135 = vmatprep.subr.mxu0 0.0
    %136 = vmatpush1.msra.mxu0 %v94
    %137 = vmatprep.subr.mxu0 0.0
    %138 = vmatpush1.msra.mxu0 %v95
    %139 = vmatprep.subr.mxu0 0.0
    %140 = vmatpush1.msra.mxu0 0.0
    %141 = vmatprep.subr.mxu0 0.0
    %142 = vmatpush1.msra.mxu0 0.0
    %143 = vmatprep.subr.mxu0 0.0
    %144 = vmatpush1.msra.mxu0 0.0
    %145 = vmatprep.subr.mxu0 0.0
    %146 = vmatpush1.msra.mxu0 0.0
    %147 = vmatprep.subr.mxu0 0.0
    %148 = vmatpush1.msra.mxu0 0.0
    %149 = vmatprep.subr.mxu0 0.0
    %150 = vmatpush1.msra.mxu0 0.0
    %151 = vmatprep.subr.mxu0 0.0
    %152 = vmatpush1.msra.mxu0 0.0
    %153 = vmatprep.subr.mxu0 0.0
    %154 = vmatpush1.msra.mxu0 0.0
    %155 = vmatprep.subr.mxu0 0.0
    %156 = vmatpush1.msra.mxu0 0.0
    %157 = vmatprep.subr.mxu0 0.0
    %158 = vmatpush1.msra.mxu0 0.0
    %159 = vmatprep.subr.mxu0 0.0
    %160 = vmatpush1.msra.mxu0 0.0
    %161 = vmatprep.subr.mxu0 0.0
    %162 = vmatpush1.msra.mxu0 0.0
    %163 = vmatprep.subr.mxu0 0.0
    %164 = vmatpush1.msra.mxu0 0.0
    %165 = vmatprep.subr.mxu0 0.0
    %166 = vmatpush1.msra.mxu0 0.0
    %167 = vmatprep.subr.mxu0 0.0
    %168 = vmatpush1.msra.mxu0 0.0
    %169 = vmatprep.subr.mxu0 0.0
    %170 = vmatpush1.msra.mxu0 0.0
    %171 = vmatprep.mubr.f32.mxu0 0.0
    %172 = vmatmul.mubr.f32.gmra.mrb[0].mxu0 %v79
    %v173 = vpop.f32.mrb[0].mxu0
    %v174 = vadd.f32 %v105, %v173
    %v175 = vpop.f32.mrb[0].mxu0
    %176 = vdwg.mxu0
    %v177 = vmax.f32 %v174, 0.0
    %vm178 = vcmp.ne.f32.partialorder %v174, %v174
    %v179 = vadd.f32 %v174, 0.0
    %v180 = vand.u32 2147483647, %v174
    %v181 = vsub.f32 0.0, %v180
    %v182 = vmul.f32 %v181, 1.442695
    %v183 = vpow.pop %v182
    %v184 = vadd.f32 %v183, 1.0
    %v185 = vlog2.pop %v184
    %v186 = vmul.f32 %v185, 0.6931472
    %v187 = vmul.f32 -0.5, %v183
    %v188 = vadd.f32 %v187, 1.0
    %v189 = vmul.f32 %v188, %v183
    %v190 = vand.u32 2147483647, %v183
    %vm191 = vcmp.lt.f32.partialorder %v190, 0.0004427343
    %v192 = vsel %vm191, %v189, %v186
    %v193 = vadd.f32 %v177, %v192
    %v194 = vsel %vm178, %v179, %v193
    %v195 = vmax.f32 %v194, 0.0
    %v196 = vmin.f32 %v195, 50.0
    %v198 = vlaneseq
    %v199 = vshrl.u32 %v198, 7
    %v200 = vsub.s32 0, %v199
    %v201 = vrot.slane %v99, %v200
    %v203 = vmul.f32 %v201, %v96
    %v204 = vsub.f32 %v196, %v203
    %205 = vst [vmem:[#allocation10] sm:$0xff] %v204
    %v207 = vlaneseq
    %v208 = vshrl.u32 %v207, 7
    %v209 = vsub.s32 0, %v208
    %v210 = vrot.slane %v100, %v209
    %v212 = vmul.f32 %v210, %v97
    %v213 = vsub.f32 %v203, %v212
    %214 = vst [vmem:[#allocation11] sm:$0xff] %v213
    // Predicated region
    $region46: #{tpu_custom_call.1} parent=1 // pred_check
      _
    $region47: #{tpu_custom_call.1} parent=1 // pred_check_branch
      %216 = sbr.rel (0) target = $region49
    $region48: #{tpu_custom_call.1} parent=1 // pred_region
      %s218 = ssub.s32 128, 128
      %219 = vsyncadd [#allocation4], %s218
      %s221 = sshll.u32 [#allocation10], 4
      %s222 = int_to_ptr.vmem [resolvable:$true] %s221
      %224 = dma.vmem_to_hbm [thread:$0]  %s222, 128, %s7, [#allocation4]
    $region49: #{tpu_custom_call.1} parent=1 // pred_fallthru
      _
    // Predicated region
    $region50: #{tpu_custom_call.1} parent=1 // pred_check
      _
    $region51: #{tpu_custom_call.1} parent=1 // pred_check_branch
      %226 = sbr.rel (0) target = $region53
    $region52: #{tpu_custom_call.1} parent=1 // pred_region
      %s228 = ssub.s32 128, 128
      %229 = vsyncadd [#allocation12], %s228
      %s231 = sshll.u32 [#allocation11], 4
      %s232 = int_to_ptr.vmem [resolvable:$true] %s231
      %234 = dma.vmem_to_hbm [thread:$0]  %s232, 128, %s8, [#allocation12]
    $region53: #{tpu_custom_call.1} parent=1 // pred_fallthru
      _
    // Predicated region
    $region54: #{tpu_custom_call.1} parent=1 // pred_check
      _
    $region55: #{tpu_custom_call.1} parent=1 // pred_check_branch
      %236 = sbr.rel (0) target = $region57
    $region56: #{tpu_custom_call.1} parent=1 // pred_region
      %237 = dma.done [#allocation4], 128
    $region57: #{tpu_custom_call.1} parent=1 // pred_fallthru
      _
    // Predicated region
    $region58: #{tpu_custom_call.1} parent=1 // pred_check
      _
    $region59: #{tpu_custom_call.1} parent=1 // pred_check_branch
      %239 = sbr.rel (0) target = $region61
    $region60: #{tpu_custom_call.1} parent=1 // pred_region
      %240 = dma.done [#allocation12], 128
    $region61: #{tpu_custom_call.1} parent=1 // pred_fallthru
      _
    %241 = vsyncpa [#allocation3], 1
    %242 = vsyncpa [#allocation6], 1
    %243 = vsyncpa [#allocation9], 1
    %244 = vsyncpa [#allocation4], 1
    %245 = vsyncpa [#allocation12], 1

</llo_original>
